<compile_context>
chip_gen: v6e
topology: v6e:2x2x1
jax: 0.10.0
libtpu: 0.0.40
codegen_flags: <defaults>
</compile_context>

<pallas_src>
import jax
import jax.numpy as jnp
from jax.experimental import pallas as pl
from jax.experimental.pallas import tpu as pltpu


def _patch_embed_kernel(x_ref, w_ref, o_ref):
    # x_ref: (TN, C*P) -- TN patches of one batch row, fused (channel, pos) axis
    # w_ref: (C*P, E)  -- resident weight (constant block index)
    # o_ref: (TN, E)
    o_ref[...] = jnp.dot(
        x_ref[...], w_ref[...], preferred_element_type=jnp.float32
    ).astype(o_ref.dtype)


def patch_embed(x, weight, patch_size):
    """Pallas PatchEmbed forward.

    Args:
      x:      (B, C, L)  -- PyTorch NCL layout.
      weight: (E, C, P)  -- nn.Conv1d weight (out, in, kernel), bias=False.
      patch_size: P (stride == kernel size).
    Returns:
      (B, L // P, E)
    """
    B, C, L = x.shape
    E = weight.shape[0]
    P = patch_size
    assert L % P == 0, "sequence length must be divisible by patch_size"
    N = L // P
    CP = C * P

    # Patchify once in JAX: (B, C, L) -> (B, N, C*P).  One extra pass over x
    # in HBM (small relative to the output stream) buys a lane-dense, fused-K
    # LHS for the MXU.
    x2 = jnp.transpose(x.reshape(B, C, N, P), (0, 2, 1, 3)).reshape(B, N, CP)

    # Weight (E, C, P) -> (C*P, E), in x.dtype (f32 accumulation in-kernel).
    # NOTE: with bf16 activations the weight is also bf16 (slight deviation
    # from the f32 PyTorch Conv1d weights; accumulation stays f32).
    w2 = jnp.transpose(weight, (1, 2, 0)).reshape(CP, E).astype(x.dtype)

    # ---- tile the patch axis ----------------------------------------------
    itemsize = jnp.dtype(x.dtype).itemsize
    # Budget for the double-buffered streaming blocks; weight (also counted
    # double-buffered) is subtracted as a fixed term.  24 MiB is safe under
    # the default 32 MiB scoped VMEM limit on every generation (incl. v7x).
    budget = 24 * 1024 * 1024 - 2 * CP * E * itemsize
    bytes_per_row = 2 * (CP + E) * itemsize          # dbl-buffered in + out row
    row_cap = max(8, budget // max(bytes_per_row, 1))
    TN = min(512, row_cap)
    if TN < N:
        TN = max(8, (TN // 8) * 8)                   # (8,128)-aligned sub-block
    else:
        TN = N                                       # full axis: no alignment needed
    # v7x megacore: guarantee >= 2 parallel grid steps when B == 1.
    if B == 1 and TN == N and N >= 16:
        TN = max(8, ((pl.cdiv(N, 2) + 7) // 8) * 8)
    n_tiles = pl.cdiv(N, TN)                         # masked tail if TN ∤ N

    flops = 2 * B * N * CP * E
    bytes_accessed = (B * N * CP * itemsize
                      + CP * E * itemsize
                      + B * N * E * itemsize)

    out = pl.pallas_call(
        _patch_embed_kernel,
        out_shape=jax.ShapeDtypeStruct((B, N, E), x.dtype),
        grid=(B, n_tiles),
        in_specs=[
            # Activation stream: one batch row, TN patches per step.
            pl.BlockSpec((None, TN, CP), lambda b, n: (b, n, 0)),
            # Weight: constant block index -> fetched once, stays VMEM-resident.
            pl.BlockSpec((CP, E), lambda b, n: (0, 0)),
        ],
        out_specs=pl.BlockSpec((None, TN, E), lambda b, n: (b, n, 0)),
        compiler_params=pltpu.CompilerParams(
            dimension_semantics=("parallel", "parallel")),
        cost_estimate=pl.CostEstimate(
            flops=flops, transcendentals=0, bytes_accessed=bytes_accessed),
    )(x2, w2)

    return out


if __name__ == "__main__":
    # Small shapes consistent with the module's forward.
    B, C_in, L = 2, 4, 16
    patch_size = 4
    embed_dim = 32

    key = jax.random.PRNGKey(0)
    kx, kw = jax.random.split(key)

    x = jax.random.normal(kx, (B, C_in, L), dtype=jnp.float32)
    # Deterministic Conv1d-style weight init (fan_in scaling), shape (E, C_in, P).
    fan_in = C_in * patch_size
    w = jax.random.normal(kw, (embed_dim, C_in, patch_size), dtype=jnp.float32)
    w = w * (1.0 / jnp.sqrt(fan_in))

    y = patch_embed(x, w, patch_size)
    y = jax.block_until_ready(y)

    # Reference: direct einsum equivalent of strided Conv1d + rearrange.
    xr = x.reshape(B, C_in, L // patch_size, patch_size)
    y_ref = jnp.einsum("bcnp,ecp->bne", xr, w)

    assert y.shape == (B, L // patch_size, embed_dim)
    assert jnp.allclose(y, y_ref, atol=1e-5, rtol=1e-5)

    print("KERNEL_OK")
</pallas_src>

<mosaic_0001>
module attributes {stable_mosaic.version = 11 : i64} {
  func.func @_patch_embed_kernel(%arg0: i32, %arg1: i32, %arg2: memref<1x4x16xf32, #tpu.memory_space<vmem>>, %arg3: memref<16x32xf32, #tpu.memory_space<vmem>>, %arg4: memref<1x4x32xf32, #tpu.memory_space<vmem>>) attributes {dimension_semantics = [#tpu.dimension_semantics<parallel>, #tpu.dimension_semantics<parallel>], iteration_bounds = array<i64: 2, 1>, scalar_prefetch = 0 : i64, scratch_operands = 0 : i64, tpu.core_type = #tpu.core_type<tc>, window_params = [{transform_indices = @transform_0, window_bounds = array<i64: 1, 4, 16>}, {pipeline_mode = #tpu.pipeline_mode<synchronous>, transform_indices = @transform_1, window_bounds = array<i64: 16, 32>}, {transform_indices = @transform_2, window_bounds = array<i64: 1, 4, 32>}]} {
    %c0 = arith.constant 0 : index
    %c0_0 = arith.constant 0 : index
    %c0_1 = arith.constant 0 : index
    %0 = vector.load %arg2[%c0, %c0_0, %c0_1] : memref<1x4x16xf32, #tpu.memory_space<vmem>>, vector<1x4x16xf32>
    %1 = vector.shape_cast %0 : vector<1x4x16xf32> to vector<4x16xf32>
    %c0_2 = arith.constant 0 : index
    %c0_3 = arith.constant 0 : index
    %2 = vector.load %arg3[%c0_2, %c0_3] : memref<16x32xf32, #tpu.memory_space<vmem>>, vector<16x32xf32>
    %cst = arith.constant dense<0.000000e+00> : vector<4x32xf32>
    %3 = tpu.matmul %1, %2, %cst {dimension_numbers = #tpu.dot_dimension_numbers<[1], [0], [0], [1], [0, 0, 1, 1], [], []>} : vector<4x16xf32>, vector<16x32xf32>, vector<4x32xf32> -> vector<4x32xf32>
    %c0_4 = arith.constant 0 : index
    %c0_5 = arith.constant 0 : index
    %c0_6 = arith.constant 0 : index
    %4 = vector.load %arg4[%c0_4, %c0_5, %c0_6] : memref<1x4x32xf32, #tpu.memory_space<vmem>>, vector<1x4x32xf32>
    %5 = vector.shape_cast %4 : vector<1x4x32xf32> to vector<4x32xf32>
    %6 = vector.shape_cast %3 : vector<4x32xf32> to vector<1x4x32xf32>
    tpu.vector_store %arg4[%c0_4, %c0_5, %c0_6], %6 {strides = array<i32>} : memref<1x4x32xf32, #tpu.memory_space<vmem>>, vector<1x4x32xf32>,
    return
  }
  func.func @transform_0(%arg0: i32, %arg1: i32) -> (i32, i32, i32) {
    %c0_i32 = arith.constant 0 : i32
    %c0_i32_0 = arith.constant 0 : i32
    return %arg0, %arg1, %c0_i32 : i32, i32, i32
  }
  func.func @transform_1(%arg0: i32, %arg1: i32) -> (i32, i32) {
    %c0_i32 = arith.constant 0 : i32
    %c0_i32_0 = arith.constant 0 : i32
    %c0_i32_1 = arith.constant 0 : i32
    return %c0_i32, %c0_i32_0 : i32, i32
  }
  func.func @transform_2(%arg0: i32, %arg1: i32) -> (i32, i32, i32) {
    %c0_i32 = arith.constant 0 : i32
    %c0_i32_0 = arith.constant 0 : i32
    return %arg0, %arg1, %c0_i32 : i32, i32, i32
  }
}

</mosaic_0001>

<llo_original>
// kernel: tpu_custom_call.1
$region0: #{tpu_custom_call.1}
  #allocation0 [shape = 'u32[]', space=smem, size = 0x4, offset = 0x4, fixed_abs, tag = 'smem constant byte address 0x4 - core index']
  #allocation1 [shape = 'u32[144,128]{1,0:T(1,128)}', space=vmem, size = 0x12000, scoped, tag = 'internal scratch']
  %s0 = inlined_call_operand.hbm [shape: f32[2,4,16], index: 0, kind: input, shape index: {}]
  %s1 = inlined_call_operand.hbm [shape: f32[16,32], index: 1, kind: input, shape index: {}]
  %s2 = inlined_call_operand.hbm [shape: f32[2,4,32], index: 2, kind: output, shape index: {}]
  %s3 = sld [smem:[#allocation0]]
  $region49: #{tpu_custom_call.1} parent=0
    _
  %s5 = ssub.s32 1, %s3
  %s6 = scalar_select 0, %s5, %s3
  $region1: #{tpu_custom_call.1} parent=0
    #allocation2 [shape = 'u8[4096]{0}', space=vmem, size = 0x1000, scoped, tag = 'input window, operand 0']
    #allocation3 [shape = 's32[2]{0}', space=sflag, size = 0x8, scoped, tag = 'scoped memory for tpu_custom_call.1']
    #allocation4 [shape = 's32[2]{0}', space=sflag, size = 0x8, scoped, tag = 'scoped memory for tpu_custom_call.1']
    #allocation5 [shape = 'u8[8192]{0}', space=vmem, size = 0x2000, scoped, tag = 'input window, operand 1, single buffered']
    #allocation6 [shape = 's32[1]{0}', space=sflag, size = 0x4, scoped, tag = 'scoped memory for tpu_custom_call.1']
    #allocation7 [shape = 'u8[4096]{0}', space=vmem, size = 0x1000, scoped, tag = 'output window, operand 0']
    %7 = vsyncpa [#allocation3], 0
    %s8 = scalar_lea.sflag [#allocation3], 1
    %9 = vsyncpa %s8, 0
    %10 = vsyncpa [#allocation6], 0
    %11 = vsyncpa [#allocation4], 0
    %s12 = scalar_lea.sflag [#allocation4], 1
    %13 = vsyncpa %s12, 0
    loop: start=0, step=1, limit=4
    $region2: #{tpu_custom_call.1} parent=1 // loop_pre_header
      _
    $region3: #{tpu_custom_call.1} parent=1 // loop_header
      %s15 = sphi 0, %s19
      %p16 = scmp.ge.s32.totalorder %s15, 4
      %s22 = sphi 0, %s34
      %s23 = sphi 0, %s30
      %s24 = sphi 0, %s22
      %s25 = sphi 0, %s23
      %s26 = sphi 0, %s24
      %s27 = sphi 0, %s25
      %s39 = sphi 0, %s41
      %s42 = sphi 0, %s39
      %s43 = sphi 0, %s42
      %s59 = sphi 0, %s43
      %s63 = sphi 0, %s63
      %s65 = sphi 0, %s63
      %s66 = sphi 0, %s65
      %s80 = sphi 0, %s66
      %s88 = sphi 0, %s90
      %s91 = sphi 0, %s88
      %s92 = sphi 0, %s91
      %s108 = sphi 0, %s92
    $region4: #{tpu_custom_call.1} parent=1 // loop_header_branch
      %18 = sbr.rel (%p16) target = $region8
    $region5: #{tpu_custom_call.1} parent=1 // loop_body
      %s20 = ssub.s32 %s15, 1
      %s21 = ssub.s32 %s15, 2
      %s28 = sadd.s32 1, %s23
      %p29 = scmp.ge.s32.totalorder %s28, 1
      %s30 = scalar_select %p29, 0, %s28
      %s31 = sadd.s32 1, %s22
      %s32 = scalar_select %p29, %s31, %s22
      %p33 = scmp.ge.s32.totalorder %s32, 2
      %s34 = scalar_select %p33, 0, %s32
      %s35 = ssub.s32 %s22, %s34
      %s36 = ssub.s32 %s23, %s30
      %s37 = sor.u32 %s35, %s36
      %p38 = scmp.eq.s32.totalorder %s37, 0
      %s40 = sadd.s32 %s39, 1
      %s41 = scalar_select %p38, %s39, %s40
      %p44 = pneg %p38
      %p45 = scmp.eq.s32.totalorder %s15, 1
      %p46 = por %p44, %p45
      %p47 = scmp.ne.s32.totalorder %s39, %s42
      %p48 = scmp.eq.s32.totalorder %s15, 0
      %p49 = por %p47, %p48
      %p50 = scmp.ne.s32.totalorder %s39, %s42
      %p51 = scmp.eq.s32.totalorder %s20, 1
      %p52 = por %p50, %p51
      %p53 = scmp.ne.s32.totalorder %s42, %s43
      %p54 = scmp.eq.s32.totalorder %s20, 0
      %p55 = por %p53, %p54
      %p56 = scmp.ne.s32.totalorder %s42, %s43
      %p57 = scmp.eq.s32.totalorder %s21, 1
      %p58 = por %p56, %p57
      %p60 = scmp.ne.s32.totalorder %s43, %s59
      %p61 = scmp.eq.s32.totalorder %s21, 0
      %p62 = por %p60, %p61
      %s64 = sadd.s32 %s63, 1
      %p67 = scmp.eq.s32.totalorder %s15, 1
      %p68 = scmp.ne.s32.totalorder %s63, %s65
      %p69 = scmp.eq.s32.totalorder %s15, 0
      %p70 = por %p68, %p69
      %p71 = scmp.ne.s32.totalorder %s63, %s65
      %p72 = scmp.eq.s32.totalorder %s20, 1
      %p73 = por %p71, %p72
      %p74 = scmp.ne.s32.totalorder %s65, %s66
      %p75 = scmp.eq.s32.totalorder %s20, 0
      %p76 = por %p74, %p75
      %p77 = scmp.ne.s32.totalorder %s65, %s66
      %p78 = scmp.eq.s32.totalorder %s21, 1
      %p79 = por %p77, %p78
      %p81 = scmp.ne.s32.totalorder %s66, %s80
      %p82 = scmp.eq.s32.totalorder %s21, 0
      %p83 = por %p81, %p82
      %s84 = ssub.s32 %s22, %s34
      %s85 = ssub.s32 %s23, %s30
      %s86 = sor.u32 %s84, %s85
      %p87 = scmp.eq.s32.totalorder %s86, 0
      %s89 = sadd.s32 %s88, 1
      %s90 = scalar_select %p87, %s88, %s89
      %p93 = pneg %p87
      %p94 = scmp.eq.s32.totalorder %s15, 1
      %p95 = por %p93, %p94
      %p96 = scmp.ne.s32.totalorder %s88, %s91
      %p97 = scmp.eq.s32.totalorder %s15, 0
      %p98 = por %p96, %p97
      %p99 = scmp.ne.s32.totalorder %s88, %s91
      %p100 = scmp.eq.s32.totalorder %s20, 1
      %p101 = por %p99, %p100
      %p102 = scmp.ne.s32.totalorder %s91, %s92
      %p103 = scmp.eq.s32.totalorder %s20, 0
      %p104 = por %p102, %p103
      %p105 = scmp.ne.s32.totalorder %s91, %s92
      %p106 = scmp.eq.s32.totalorder %s21, 1
      %p107 = por %p105, %p106
      %p109 = scmp.ne.s32.totalorder %s92, %s108
      %p110 = scmp.eq.s32.totalorder %s21, 0
      %p111 = por %p109, %p110
      %p112 = scmp.le.s32.totalorder 1, %s15
      %p113 = scmp.lt.s32.totalorder %s15, 3
      %p114 = pnand %p112, %p113
      %p115 = pneg %p114
      // Predicated region
      $region9: #{tpu_custom_call.1} parent=5 // pred_check
        _
      $region10: #{tpu_custom_call.1} parent=5 // pred_check_branch
        %117 = sbr.rel (%p114) target = $region12
      $region11: #{tpu_custom_call.1} parent=5 // pred_region
        %s118 = ssub.s32 %s15, 1
        // Predicated region
        $region13: #{tpu_custom_call.1} parent=11 // pred_check
          %p119 = pneg %p76
        $region14: #{tpu_custom_call.1} parent=11 // pred_check_branch
          %121 = sbr.rel (%p119) target = $region16
        $region15: #{tpu_custom_call.1} parent=11 // pred_region
          %s123 = ssub.s32 256, 256
          %124 = vsyncadd [#allocation6], %s123
          %s125 = sshll.u32 [#allocation5], 4
          %s126 = int_to_ptr.vmem [resolvable:$true] %s125
          %131 = dma.hbm_to_vmem [thread:$0]  %s1, 256, %s126, [#allocation6], 128, 128, 8
        $region16: #{tpu_custom_call.1} parent=11 // pred_fallthru
          _
      $region12: #{tpu_custom_call.1} parent=5 // pred_fallthru
        _
      %p132 = scmp.lt.s32.totalorder %s15, 2
      // Predicated region
      $region17: #{tpu_custom_call.1} parent=5 // pred_check
        %p133 = pneg %p132
      $region18: #{tpu_custom_call.1} parent=5 // pred_check_branch
        %135 = sbr.rel (%p133) target = $region20
      $region19: #{tpu_custom_call.1} parent=5 // pred_region
        // Predicated region
        $region21: #{tpu_custom_call.1} parent=19 // pred_check
          %p136 = pneg %p49
        $region22: #{tpu_custom_call.1} parent=19 // pred_check_branch
          %138 = sbr.rel (%p136) target = $region24
        $region23: #{tpu_custom_call.1} parent=19 // pred_region
          %s139 = sand.u32 %s39, 1
          %s140 = scalar_lea.sflag [#allocation3], %s139
          %s141 = sand.u32 %s39, 1
          %s142 = smul.addr %s141, 4
          %s143 = scalar_lea.vmem [#allocation2], %s142
          %s145 = ssub.s32 64, 64
          %146 = vsyncadd %s140, %s145
          %s147 = sadd.s32 %s23, %s22
          %s148 = smul.addr %s147, 64
          %s149 = scalar_lea.hbm %s0, %s148
          %s151 = sshll.u32 %s143, 4
          %s152 = int_to_ptr.vmem [resolvable:$true] %s151
          %154 = dma.hbm_to_vmem [thread:$0]  %s149, 64, %s152, %s140
        $region24: #{tpu_custom_call.1} parent=19 // pred_fallthru
          _
      $region20: #{tpu_custom_call.1} parent=5 // pred_fallthru
        _
      %p155 = scmp.le.s32.totalorder 1, %s15
      %p156 = scmp.lt.s32.totalorder %s15, 3
      %p157 = pnand %p155, %p156
      %p158 = pneg %p157
      // Predicated region
      $region25: #{tpu_custom_call.1} parent=5 // pred_check
        _
      $region26: #{tpu_custom_call.1} parent=5 // pred_check_branch
        %160 = sbr.rel (%p157) target = $region28
      $region27: #{tpu_custom_call.1} parent=5 // pred_region
        %s161 = ssub.s32 %s15, 1
        %s162 = sand.u32 %s42, 1
        %s163 = scalar_lea.sflag [#allocation3], %s162
        %s164 = sand.u32 %s42, 1
        %s165 = smul.addr %s164, 4
        %s166 = scalar_lea.vmem [#allocation2], %s165
        // Predicated region
        $region29: #{tpu_custom_call.1} parent=27 // pred_check
          %p167 = pneg %p55
        $region30: #{tpu_custom_call.1} parent=27 // pred_check_branch
          %169 = sbr.rel (%p167) target = $region32
        $region31: #{tpu_custom_call.1} parent=27 // pred_region
          %170 = dma.done %s163, 64
        $region32: #{tpu_custom_call.1} parent=27 // pred_fallthru
          _
        // Predicated region
        $region33: #{tpu_custom_call.1} parent=27 // pred_check
          %p171 = pneg %p76
        $region34: #{tpu_custom_call.1} parent=27 // pred_check_branch
          %173 = sbr.rel (%p171) target = $region36
        $region35: #{tpu_custom_call.1} parent=27 // pred_region
          %174 = dma.done [#allocation6], 256
        $region36: #{tpu_custom_call.1} parent=27 // pred_fallthru
          _
        %s175 = sand.u32 %s42, 1
        %s176 = scalar_lea.sflag [#allocation3], %s175
        %s177 = sand.u32 %s42, 1
        %s178 = smul.addr %s177, 4
        %s179 = scalar_lea.vmem [#allocation2], %s178
        %p180 = pneg %p55
        %p181 = pneg %p52
        %p182 = pneg %p76
        %p183 = pneg %p73
        %p184 = pneg %p104
        %p185 = pneg %p101
        %s186 = sand.u32 %s91, 1
        %s187 = scalar_lea.sflag [#allocation4], %s186
        %s188 = sand.u32 %s91, 1
        %s189 = smul.addr %s188, 4
        %s190 = scalar_lea.vmem [#allocation7], %s189
        %v191 = vld [vmem:[%s166] sm:$0xf]
        %v192 = vld [vmem:[#allocation5] sm:$0xff]
        %v193 = vld [vmem:[#allocation5 + $0x8] sm:$0xff]
        %vm194 = vcmask 130048
        %v196 = vsel %vm194, %v191, 0
        %198 = vmatprep.subr.mxu0 0.0
        %199 = vmatpush1.msra.mxu0 0.0
        %200 = vmatprep.subr.mxu0 0.0
        %201 = vmatpush1.msra.mxu0 0.0
        %202 = vmatprep.subr.mxu0 0.0
        %203 = vmatpush1.msra.mxu0 0.0
        %204 = vmatprep.subr.mxu0 0.0
        %205 = vmatpush1.msra.mxu0 0.0
        %206 = vmatprep.subr.mxu0 0.0
        %207 = vmatpush1.msra.mxu0 0.0
        %208 = vmatprep.subr.mxu0 0.0
        %209 = vmatpush1.msra.mxu0 0.0
        %210 = vmatprep.subr.mxu0 0.0
        %211 = vmatpush1.msra.mxu0 0.0
        %212 = vmatprep.subr.mxu0 0.0
        %213 = vmatpush1.msra.mxu0 0.0
        %214 = vmatprep.subr.mxu0 0.0
        %215 = vmatpush1.msra.mxu0 0.0
        %216 = vmatprep.subr.mxu0 0.0
        %217 = vmatpush1.msra.mxu0 0.0
        %218 = vmatprep.subr.mxu0 0.0
        %219 = vmatpush1.msra.mxu0 0.0
        %220 = vmatprep.subr.mxu0 0.0
        %221 = vmatpush1.msra.mxu0 0.0
        %222 = vmatprep.subr.mxu0 0.0
        %223 = vmatpush1.msra.mxu0 0.0
        %224 = vmatprep.subr.mxu0 0.0
        %225 = vmatpush1.msra.mxu0 0.0
        %226 = vmatprep.subr.mxu0 0.0
        %227 = vmatpush1.msra.mxu0 %v193
        %228 = vmatprep.subr.mxu0 0.0
        %229 = vmatpush1.msra.mxu0 %v192
        %230 = vmatprep.subr.mxu0 0.0
        %231 = vmatpush2.msra.mxu0 0.0
        %232 = vmatprep.subr.mxu0 0.0
        %233 = vmatpush2.msra.mxu0 0.0
        %234 = vmatprep.subr.mxu0 0.0
        %235 = vmatpush2.msra.mxu0 0.0
        %236 = vmatprep.subr.mxu0 0.0
        %237 = vmatpush2.msra.mxu0 0.0
        %238 = vmatprep.subr.mxu0 0.0
        %239 = vmatpush2.msra.mxu0 0.0
        %240 = vmatprep.subr.mxu0 0.0
        %241 = vmatpush2.msra.mxu0 0.0
        %242 = vmatprep.subr.mxu0 0.0
        %243 = vmatpush2.msra.mxu0 0.0
        %244 = vmatprep.subr.mxu0 0.0
        %245 = vmatpush2.msra.mxu0 0.0
        %246 = vmatprep.subr.mxu0 0.0
        %247 = vmatpush2.msra.mxu0 0.0
        %248 = vmatprep.subr.mxu0 0.0
        %249 = vmatpush2.msra.mxu0 0.0
        %250 = vmatprep.subr.mxu0 0.0
        %251 = vmatpush2.msra.mxu0 0.0
        %252 = vmatprep.subr.mxu0 0.0
        %253 = vmatpush2.msra.mxu0 0.0
        %254 = vmatprep.subr.mxu0 0.0
        %255 = vmatpush2.msra.mxu0 0.0
        %256 = vmatprep.subr.mxu0 0.0
        %257 = vmatpush2.msra.mxu0 0.0
        %258 = vmatprep.subr.mxu0 0.0
        %259 = vmatpush2.msra.mxu0 0.0
        %260 = vmatprep.subr.mxu0 0.0
        %261 = vmatpush2.msra.mxu0 0.0
        %262 = vmatprep.mubr.f32.mxu0 0.0
        %263 = vmatmul.mubr.f32.gmra.mxu0 %v196
        %v264 = vpop.f32.mrf.mxu0
        %v265 = vadd.f32 0.0, %v264
        %v266 = vpop.f32.mrf.mxu0
        %267 = vdwg.mxu0
        %vm268 = vcmask 257024
        %269 = vst.msk [vmem:[%s190] sm:$0xf] %vm268, %v265
        %s270 = sand.u32 %s91, 1
        %s271 = scalar_lea.sflag [#allocation4], %s270
        %s272 = sand.u32 %s91, 1
        %s273 = smul.addr %s272, 4
        %s274 = scalar_lea.vmem [#allocation7], %s273
        // Predicated region
        $region37: #{tpu_custom_call.1} parent=27 // pred_check
          %p275 = pneg %p101
        $region38: #{tpu_custom_call.1} parent=27 // pred_check_branch
          %277 = sbr.rel (%p275) target = $region40
        $region39: #{tpu_custom_call.1} parent=27 // pred_region
          %s279 = ssub.s32 64, 64
          %280 = vsyncadd %s271, %s279
          %s281 = sadd.s32 %s25, %s24
          %s282 = smul.addr %s281, 64
          %s283 = scalar_lea.hbm %s2, %s282
          %s285 = sshll.u32 %s274, 4
          %s286 = int_to_ptr.vmem [resolvable:$true] %s285
          %288 = dma.vmem_to_hbm [thread:$0]  %s286, 64, %s283, %s271
        $region40: #{tpu_custom_call.1} parent=27 // pred_fallthru
          _
      $region28: #{tpu_custom_call.1} parent=5 // pred_fallthru
        _
      %p289 = scmp.le.s32.totalorder 2, %s15
      // Predicated region
      $region41: #{tpu_custom_call.1} parent=5 // pred_check
        %p290 = pneg %p289
      $region42: #{tpu_custom_call.1} parent=5 // pred_check_branch
        %292 = sbr.rel (%p290) target = $region44
      $region43: #{tpu_custom_call.1} parent=5 // pred_region
        %s293 = ssub.s32 %s15, 2
        // Predicated region
        $region45: #{tpu_custom_call.1} parent=43 // pred_check
          %p294 = pneg %p107
        $region46: #{tpu_custom_call.1} parent=43 // pred_check_branch
          %296 = sbr.rel (%p294) target = $region48
        $region47: #{tpu_custom_call.1} parent=43 // pred_region
          %s297 = sand.u32 %s92, 1
          %s298 = scalar_lea.sflag [#allocation4], %s297
          %s299 = sand.u32 %s92, 1
          %s300 = smul.addr %s299, 4
          %s301 = scalar_lea.vmem [#allocation7], %s300
          %302 = dma.done %s298, 64
        $region48: #{tpu_custom_call.1} parent=43 // pred_fallthru
          _
      $region44: #{tpu_custom_call.1} parent=5 // pred_fallthru
        _
    $region6: #{tpu_custom_call.1} parent=1 // loop_footer
      %s19 = sadd.s32 1, %s15
    $region7: #{tpu_custom_call.1} parent=1 // loop_footer_branch
      %14 = sbr.rel target = $region3
    $region8: #{tpu_custom_call.1} parent=1 // loop_exit
      _
    %303 = vsyncpa [#allocation3], 1
    %s304 = scalar_lea.sflag [#allocation3], 1
    %305 = vsyncpa %s304, 1
    %306 = vsyncpa [#allocation6], 1
    %307 = vsyncpa [#allocation4], 1
    %s308 = scalar_lea.sflag [#allocation4], 1
    %309 = vsyncpa %s308, 1

</llo_original>
